<compile_context>
chip_gen: v7x
topology: tpu7x:2x2x1
jax: 0.10.0
libtpu: 0.0.40
codegen_flags: <defaults>
</compile_context>

<pallas_src>
import functools

import jax
import jax.numpy as jnp
from jax import lax
from jax.experimental import pallas as pl
from jax.experimental.pallas import tpu as pltpu


def _round_up(a, b):
    return ((a + b - 1) // b) * b


def _device_kind():
    try:
        return jax.devices()[0].device_kind.lower()
    except Exception:
        return ""


def _default_lane_width():
    kind = _device_kind()
    # v6e / v7x have 2x256x256 MXUs -> pack 256 lanes; older chips keep 128.
    if any(tag in kind for tag in ("v6", "v7", "7x")):
        return 256
    return 128


def _dual_core():
    kind = _device_kind()
    return ("v7" in kind) or ("7x" in kind)


# ----------------------------------------------------------------------------
# Kernel: gather P tokens per row via one-hot @ block-diagonal (pre-normalized)
# table.  Everything lane-dense; LN and dropout(eval) are already folded /
# identity, so the kernel is purely MXU + store.
# ----------------------------------------------------------------------------
def _binned_embed_kernel(idx_ref, wblk_ref, out_ref):
    # idx_ref  : VMEM (R, P) int32  -- ids pre-offset by p*V_pad per column
    # wblk_ref : VMEM (P*V_pad, P*D_pad) -- block-diag LN-folded table (resident)
    # out_ref  : VMEM (R, P*D_pad)  -- lane-dense packed output block
    R, P = idx_ref.shape
    KV = wblk_ref.shape[0]

    idx = idx_ref[...]                                       # (R, P) int32
    col = lax.broadcasted_iota(jnp.int32, (R, KV), 1)        # lane index

    # P independent compares, OR-combined (disjoint segments -> no conflicts).
    hit = col == idx[:, 0:1]
    for p in range(1, P):
        hit = jnp.logical_or(hit, col == idx[:, p:p + 1])
    onehot = hit.astype(wblk_ref.dtype)                      # (R, KV)

    # Gather as a single MXU matmul against the block-diagonal table.
    out_ref[...] = jnp.dot(onehot, wblk_ref[...],
                           preferred_element_type=jnp.float32).astype(out_ref.dtype)


# ----------------------------------------------------------------------------
# One-time preparation (hoist out of the hot path): fold LayerNorm into the
# table and build the block-diagonal, lane-packed replica.
# ----------------------------------------------------------------------------
def prepare_binned_embed(emb_w, gamma=None, beta=None, *, layer_norm=True,
                         eps=1e-5, lane_width=None):
    V, D = emb_w.shape
    if lane_width is None:
        lane_width = _default_lane_width()

    table = emb_w.astype(jnp.float32)
    if layer_norm:
        mean = jnp.mean(table, axis=-1, keepdims=True)
        var = jnp.mean(jnp.square(table - mean), axis=-1, keepdims=True)
        table = (table - mean) * lax.rsqrt(var + eps)
        table = (table * gamma.astype(jnp.float32)[None, :]
                 + beta.astype(jnp.float32)[None, :])
    table = table.astype(emb_w.dtype)

    # Lane packing: P tokens side by side -> each output row is `lane_width`
    # (or a multiple of 128) lanes, so all stores are unmasked / full-lane.
    if D <= lane_width and lane_width % D == 0:
        P, D_pad = lane_width // D, D
    else:
        P, D_pad = 1, _round_up(D, 128)      # pad D up -> still lane-dense
    V_pad = _round_up(V, 8)

    W = P * D_pad                            # packed output row width
    KV = P * V_pad                           # packed one-hot width (K of matmul)

    wblk = jnp.zeros((KV, W), emb_w.dtype)
    for p in range(P):
        wblk = wblk.at[p * V_pad:p * V_pad + V,
                       p * D_pad:p * D_pad + D].set(table)

    return dict(wblk=wblk, V=V, D=D, P=P, V_pad=V_pad, D_pad=D_pad, W=W, KV=KV,
                out_dtype=emb_w.dtype)


# ----------------------------------------------------------------------------
# Apply: one grid step per token block of R rows (= R*P tokens).
# ----------------------------------------------------------------------------
def binned_embed_apply(x, prep, *, block_rows=1024):
    orig_shape = x.shape
    V, D, P = prep["V"], prep["D"], prep["P"]
    V_pad, D_pad, W, KV = prep["V_pad"], prep["D_pad"], prep["W"], prep["KV"]

    idx = jnp.clip(x.reshape(-1).astype(jnp.int32), 0, V - 1)     # [N]
    n = idx.shape[0]

    rows_needed = -(-n // P)                                       # ceil(n / P)
    R = min(block_rows, _round_up(rows_needed, 8))
    # v7x has 2 TensorCores sharing the (parallel) grid axis: prefer >= 2 blocks.
    if _dual_core() and rows_needed > 8 and _round_up(rows_needed, R) // R == 1 and R > 8:
        R = _round_up(-(-R // 2), 8)
    rows_pad = _round_up(rows_needed, R)
    num_blocks = rows_pad // R
    n_pad = rows_pad * P

    # Pre-offset ids per packed column so the kernel does no scalar adds; pad
    # tokens land in their own column's segment -> cannot corrupt valid tokens.
    offs = (jnp.arange(P, dtype=jnp.int32) * V_pad)[None, :]
    idx2d = jnp.pad(idx, (0, n_pad - n)).reshape(rows_pad, P) + offs

    out = pl.pallas_call(
        _binned_embed_kernel,
        out_shape=jax.ShapeDtypeStruct((rows_pad, W), prep["out_dtype"]),
        grid_spec=pltpu.PrefetchScalarGridSpec(
            num_scalar_prefetch=0,
            grid=(num_blocks,),
            in_specs=[
                pl.BlockSpec((R, P), lambda i: (i, 0)),      # token ids (blocked)
                pl.BlockSpec((KV, W), lambda i: (0, 0)),     # table (VMEM-resident)
            ],
            out_specs=pl.BlockSpec((R, W), lambda i: (i, 0)),  # lane-dense output
        ),
        compiler_params=pltpu.CompilerParams(
            dimension_semantics=("parallel",),
            vmem_limit_bytes=32 * 1024 * 1024),
    )(idx2d, prep["wblk"])

    out = out.reshape(n_pad, D_pad)[:n, :D]                  # unpack + drop padding
    return out.reshape(*orig_shape, D)


def binned_embed(x, emb_w, gamma=None, beta=None, *, layer_norm=True, eps=1e-5,
                 block_rows=1024, lane_width=None):
    """Convenience wrapper (prepare + apply). Prefer prepare_binned_embed()
    once per weight update and binned_embed_apply() in the hot path."""
    # TODO(synk): training-mode dropout (pltpu.prng_* + mask/scale) not emitted;
    #             forward here matches module.eval() semantics (Dropout = identity).
    prep = prepare_binned_embed(emb_w, gamma, beta, layer_norm=layer_norm,
                                eps=eps, lane_width=lane_width)
    return binned_embed_apply(x, prep, block_rows=block_rows)


def _reference(x, emb_w, gamma, beta, *, layer_norm=True, eps=1e-5):
    emb = emb_w[x.reshape(-1)]
    if layer_norm:
        mean = jnp.mean(emb, axis=-1, keepdims=True)
        var = jnp.mean(jnp.square(emb - mean), axis=-1, keepdims=True)
        emb = (emb - mean) * lax.rsqrt(var + eps)
        emb = emb * gamma[None, :] + beta[None, :]
    return emb.reshape(*x.shape, emb_w.shape[1])


if __name__ == "__main__":
    # Module config: in_dim = vocab size (bins), config.dim = out_dim,
    # layer_norm=True, pre_layer_norm=False, dropout (eval) = identity.
    IN_DIM = 16      # number of bins
    OUT_DIM = 32     # embedding dim
    B, S = 2, 8

    key = jax.random.PRNGKey(0)
    k_x, k_w, k_g, k_b = jax.random.split(key, 4)

    emb_w = jax.random.normal(k_w, (IN_DIM, OUT_DIM), dtype=jnp.float32)   # Embedding.weight
    gamma = 1.0 + 0.1 * jax.random.normal(k_g, (OUT_DIM,), dtype=jnp.float32)  # LayerNorm.weight
    beta = 0.05 * jax.random.normal(k_b, (OUT_DIM,), dtype=jnp.float32)        # LayerNorm.bias

    # Prepare once (hoisted out of the hot path), reuse across calls.
    prep = prepare_binned_embed(emb_w, gamma, beta, layer_norm=True)

    x = jax.random.randint(k_x, (B, S), 0, IN_DIM, dtype=jnp.int32)
    out = jax.block_until_ready(binned_embed_apply(x, prep))
    ref = _reference(x, emb_w, gamma, beta, layer_norm=True)
    assert out.shape == (B, S, OUT_DIM), out.shape
    assert jnp.allclose(out, ref, atol=1e-5, rtol=1e-5), \
        float(jnp.max(jnp.abs(out - ref)))

    # Multi-block / padded-tail path (exercises grid > 1 and ragged n).
    x2 = jax.random.randint(jax.random.PRNGKey(1), (4, 37), 0, IN_DIM, dtype=jnp.int32)
    out2 = jax.block_until_ready(binned_embed_apply(x2, prep, block_rows=8))
    ref2 = _reference(x2, emb_w, gamma, beta, layer_norm=True)
    assert jnp.allclose(out2, ref2, atol=1e-5, rtol=1e-5), \
        float(jnp.max(jnp.abs(out2 - ref2)))

    # layer_norm=False path (nn.Identity).
    out3 = jax.block_until_ready(binned_embed(x, emb_w, layer_norm=False))
    ref3 = _reference(x, emb_w, gamma, beta, layer_norm=False)
    assert jnp.allclose(out3, ref3, atol=1e-5, rtol=1e-5), \
        float(jnp.max(jnp.abs(out3 - ref3)))

    print("KERNEL_OK")
</pallas_src>

<mosaic_0001>
module attributes {stable_mosaic.version = 11 : i64} {
  func.func @_binned_embed_kernel(%arg0: i32, %arg1: memref<8x4xi32, #tpu.memory_space<vmem>>, %arg2: memref<64x128xf32, #tpu.memory_space<vmem>>, %arg3: memref<8x128xf32, #tpu.memory_space<vmem>>) attributes {dimension_semantics = [#tpu.dimension_semantics<parallel>], iteration_bounds = array<i64: 1>, scalar_prefetch = 0 : i64, scratch_operands = 0 : i64, tpu.core_type = #tpu.core_type<tc>, window_params = [{transform_indices = @transform_0, window_bounds = array<i64: 8, 4>}, {pipeline_mode = #tpu.pipeline_mode<synchronous>, transform_indices = @transform_1, window_bounds = array<i64: 64, 128>}, {transform_indices = @transform_2, window_bounds = array<i64: 8, 128>}]} {
    %c0 = arith.constant 0 : index
    %c0_0 = arith.constant 0 : index
    %0 = vector.load %arg1[%c0, %c0_0] : memref<8x4xi32, #tpu.memory_space<vmem>>, vector<8x4xi32>
    %1 = tpu.iota {dimensions = array<i32: 1>} : vector<8x64xi32>
    %2 = vector.extract_strided_slice %0 {offsets = [0, 0], sizes = [8, 1], strides = [1, 1]} : vector<8x4xi32> to vector<8x1xi32>
    %3 = vector.broadcast %2 : vector<8x1xi32> to vector<8x64xi32>
    %4 = arith.cmpi eq, %1, %3 : vector<8x64xi32>
    %5 = vector.extract_strided_slice %0 {offsets = [0, 1], sizes = [8, 1], strides = [1, 1]} : vector<8x4xi32> to vector<8x1xi32>
    %6 = vector.broadcast %5 : vector<8x1xi32> to vector<8x64xi32>
    %7 = arith.cmpi eq, %1, %6 : vector<8x64xi32>
    %8 = arith.ori %4, %7 : vector<8x64xi1>
    %9 = vector.extract_strided_slice %0 {offsets = [0, 2], sizes = [8, 1], strides = [1, 1]} : vector<8x4xi32> to vector<8x1xi32>
    %10 = vector.broadcast %9 : vector<8x1xi32> to vector<8x64xi32>
    %11 = arith.cmpi eq, %1, %10 : vector<8x64xi32>
    %12 = arith.ori %8, %11 : vector<8x64xi1>
    %13 = vector.extract_strided_slice %0 {offsets = [0, 3], sizes = [8, 1], strides = [1, 1]} : vector<8x4xi32> to vector<8x1xi32>
    %14 = vector.broadcast %13 : vector<8x1xi32> to vector<8x64xi32>
    %15 = arith.cmpi eq, %1, %14 : vector<8x64xi32>
    %16 = arith.ori %12, %15 : vector<8x64xi1>
    %17 = arith.extui %16 : vector<8x64xi1> to vector<8x64xi32>
    %18 = arith.sitofp %17 : vector<8x64xi32> to vector<8x64xf32>
    %c0_1 = arith.constant 0 : index
    %c0_2 = arith.constant 0 : index
    %19 = vector.load %arg2[%c0_1, %c0_2] : memref<64x128xf32, #tpu.memory_space<vmem>>, vector<64x128xf32>
    %cst = arith.constant dense<0.000000e+00> : vector<8x128xf32>
    %20 = tpu.matmul %18, %19, %cst {dimension_numbers = #tpu.dot_dimension_numbers<[1], [0], [0], [1], [0, 0, 1, 1], [], []>} : vector<8x64xf32>, vector<64x128xf32>, vector<8x128xf32> -> vector<8x128xf32>
    %c0_3 = arith.constant 0 : index
    %c0_4 = arith.constant 0 : index
    %21 = vector.load %arg3[%c0_3, %c0_4] : memref<8x128xf32, #tpu.memory_space<vmem>>, vector<8x128xf32>
    tpu.vector_store %arg3[%c0_3, %c0_4], %20 {strides = array<i32>} : memref<8x128xf32, #tpu.memory_space<vmem>>, vector<8x128xf32>,
    return
  }
  func.func @transform_0(%arg0: i32) -> (i32, i32) {
    %c0_i32 = arith.constant 0 : i32
    %c0_i32_0 = arith.constant 0 : i32
    return %arg0, %c0_i32 : i32, i32
  }
  func.func @transform_1(%arg0: i32) -> (i32, i32) {
    %c0_i32 = arith.constant 0 : i32
    %c0_i32_0 = arith.constant 0 : i32
    %c0_i32_1 = arith.constant 0 : i32
    return %c0_i32, %c0_i32_0 : i32, i32
  }
  func.func @transform_2(%arg0: i32) -> (i32, i32) {
    %c0_i32 = arith.constant 0 : i32
    %c0_i32_0 = arith.constant 0 : i32
    return %arg0, %c0_i32 : i32, i32
  }
}

</mosaic_0001>

<llo_original>
// kernel: tpu_custom_call.1
$region0: #{tpu_custom_call.1}
  #allocation0 [shape = 'u32[]', space=smem, size = 0x4, offset = 0x4, fixed_abs, tag = 'smem constant byte address 0x4 - core index']
  #allocation1 [shape = 'u32[144,128]{1,0:T(1,128)}', space=vmem, size = 0x12000, scoped, tag = 'internal scratch']
  %s0 = inlined_call_operand.vmem [shape: s32[8,4], index: 0, kind: input, shape index: {}]
  %s1 = inlined_call_operand.hbm [shape: f32[64,128], index: 1, kind: input, shape index: {}]
  %s2 = inlined_call_operand.hbm [shape: f32[8,128], index: 2, kind: output, shape index: {}]
  %s3 = sld [smem:[#allocation0]]
  $region22: #{tpu_custom_call.1} parent=0
    _
  %s5 = ssub.s32 1, %s3
  %s6 = scalar_select 0, %s5, %s3
  $region1: #{tpu_custom_call.1} parent=0
    #allocation2 [shape = 'u8[32768]{0}', space=vmem, size = 0x8000, scoped, tag = 'input window, operand 1, single buffered']
    #allocation3 [shape = 's32[1]{0}', space=sflag, size = 0x4, scoped, tag = 'scoped memory for tpu_custom_call.1']
    #allocation4 [shape = 's32[1]{0}', space=sflag, size = 0x4, scoped, tag = 'scoped memory for tpu_custom_call.1']
    #allocation5 [shape = 'u8[4096]{0}', space=vmem, size = 0x1000, scoped, tag = 'output window, operand 0, single buffered']
    %7 = vsyncpa [#allocation3], 0
    %8 = vsyncpa [#allocation4], 0
    // Predicated region
    $region2: #{tpu_custom_call.1} parent=1 // pred_check
      _
    $region3: #{tpu_custom_call.1} parent=1 // pred_check_branch
      %10 = sbr.rel (0) target = $region5
    $region4: #{tpu_custom_call.1} parent=1 // pred_region
      _
    $region5: #{tpu_custom_call.1} parent=1 // pred_fallthru
      _
    // Predicated region
    $region6: #{tpu_custom_call.1} parent=1 // pred_check
      _
    $region7: #{tpu_custom_call.1} parent=1 // pred_check_branch
      %12 = sbr.rel (0) target = $region9
    $region8: #{tpu_custom_call.1} parent=1 // pred_region
      %s14 = ssub.s32 1024, 1024
      %15 = vsyncadd [#allocation3], %s14
      %s16 = sshll.u32 [#allocation2], 4
      %s17 = int_to_ptr.vmem [resolvable:$true] %s16
      %22 = dma.hbm_to_vmem [thread:$0]  %s1, 1024, %s17, [#allocation3], 128, 128, 8
    $region9: #{tpu_custom_call.1} parent=1 // pred_fallthru
      _
    // Predicated region
    $region10: #{tpu_custom_call.1} parent=1 // pred_check
      _
    $region11: #{tpu_custom_call.1} parent=1 // pred_check_branch
      %24 = sbr.rel (0) target = $region13
    $region12: #{tpu_custom_call.1} parent=1 // pred_region
      %25 = dma.done [#allocation3], 1024
    $region13: #{tpu_custom_call.1} parent=1 // pred_fallthru
      _
    %v26 = vld [vmem:[%s0] sm:$0xff]
    %v27 = vlaneseq
    %v28 = vand.u32 %v27, 127
    %29 = vset.pattern.permute.xlu0 0
    %30 = vperm.xlu0 %29, %v26
    %v31 = vpop.permute.xlu0 %30
    %vm32 = vcmp.eq.s32.totalorder %v28, %v31
    %33 = vset.pattern.permute.xlu0 1
    %34 = vperm.xlu0 %33, %v26
    %v35 = vpop.permute.xlu0 %34
    %vm36 = vcmp.eq.s32.totalorder %v28, %v35
    %vm37 = vmor %vm32, %vm36
    %38 = vset.pattern.permute.xlu0 2
    %39 = vperm.xlu0 %38, %v26
    %v40 = vpop.permute.xlu0 %39
    %vm41 = vcmp.eq.s32.totalorder %v28, %v40
    %vm42 = vmor %vm37, %vm41
    %43 = vset.pattern.permute.xlu0 3
    %44 = vperm.xlu0 %43, %v26
    %v45 = vpop.permute.xlu0 %44
    %vm46 = vcmp.eq.s32.totalorder %v28, %v45
    %vm47 = vmor %vm42, %vm46
    %v48 = vsel %vm47, 1, 0
    %v49 = vcvt.s32.f32 %v48
    %v50 = vld [vmem:[#allocation2] sm:$0xff]
    %v51 = vld [vmem:[#allocation2 + $0x8] sm:$0xff]
    %v52 = vld [vmem:[#allocation2 + $0x10] sm:$0xff]
    %v53 = vld [vmem:[#allocation2 + $0x18] sm:$0xff]
    %v54 = vld [vmem:[#allocation2 + $0x20] sm:$0xff]
    %v55 = vld [vmem:[#allocation2 + $0x28] sm:$0xff]
    %v56 = vld [vmem:[#allocation2 + $0x30] sm:$0xff]
    %v57 = vld [vmem:[#allocation2 + $0x38] sm:$0xff]
    %vm58 = vcmask 523264
    %v60 = vsel %vm58, %v49, 0
    %62 = vmatprep.subr.mxu0 0.0
    %63 = vmatpush1.msra.mxu0 %v50
    %64 = vmatprep.subr.mxu0 0.0
    %65 = vmatpush1.msra.mxu0 %v51
    %66 = vmatprep.subr.mxu0 0.0
    %67 = vmatpush1.msra.mxu0 %v52
    %68 = vmatprep.subr.mxu0 0.0
    %69 = vmatpush1.msra.mxu0 %v53
    %70 = vmatprep.subr.mxu0 0.0
    %71 = vmatpush1.msra.mxu0 %v54
    %72 = vmatprep.subr.mxu0 0.0
    %73 = vmatpush1.msra.mxu0 %v55
    %74 = vmatprep.subr.mxu0 0.0
    %75 = vmatpush1.msra.mxu0 %v56
    %76 = vmatprep.subr.mxu0 0.0
    %77 = vmatpush1.msra.mxu0 %v57
    %78 = vmatprep.subr.mxu0 0.0
    %79 = vmatpush1.msra.mxu0 0.0
    %80 = vmatprep.subr.mxu0 0.0
    %81 = vmatpush1.msra.mxu0 0.0
    %82 = vmatprep.subr.mxu0 0.0
    %83 = vmatpush1.msra.mxu0 0.0
    %84 = vmatprep.subr.mxu0 0.0
    %85 = vmatpush1.msra.mxu0 0.0
    %86 = vmatprep.subr.mxu0 0.0
    %87 = vmatpush1.msra.mxu0 0.0
    %88 = vmatprep.subr.mxu0 0.0
    %89 = vmatpush1.msra.mxu0 0.0
    %90 = vmatprep.subr.mxu0 0.0
    %91 = vmatpush1.msra.mxu0 0.0
    %92 = vmatprep.subr.mxu0 0.0
    %93 = vmatpush1.msra.mxu0 0.0
    %94 = vmatprep.subr.mxu0 0.0
    %95 = vmatpush1.msra.mxu0 0.0
    %96 = vmatprep.subr.mxu0 0.0
    %97 = vmatpush1.msra.mxu0 0.0
    %98 = vmatprep.subr.mxu0 0.0
    %99 = vmatpush1.msra.mxu0 0.0
    %100 = vmatprep.subr.mxu0 0.0
    %101 = vmatpush1.msra.mxu0 0.0
    %102 = vmatprep.subr.mxu0 0.0
    %103 = vmatpush1.msra.mxu0 0.0
    %104 = vmatprep.subr.mxu0 0.0
    %105 = vmatpush1.msra.mxu0 0.0
    %106 = vmatprep.subr.mxu0 0.0
    %107 = vmatpush1.msra.mxu0 0.0
    %108 = vmatprep.subr.mxu0 0.0
    %109 = vmatpush1.msra.mxu0 0.0
    %110 = vmatprep.subr.mxu0 0.0
    %111 = vmatpush1.msra.mxu0 0.0
    %112 = vmatprep.subr.mxu0 0.0
    %113 = vmatpush1.msra.mxu0 0.0
    %114 = vmatprep.subr.mxu0 0.0
    %115 = vmatpush1.msra.mxu0 0.0
    %116 = vmatprep.subr.mxu0 0.0
    %117 = vmatpush1.msra.mxu0 0.0
    %118 = vmatprep.subr.mxu0 0.0
    %119 = vmatpush1.msra.mxu0 0.0
    %120 = vmatprep.subr.mxu0 0.0
    %121 = vmatpush1.msra.mxu0 0.0
    %122 = vmatprep.subr.mxu0 0.0
    %123 = vmatpush1.msra.mxu0 0.0
    %124 = vmatprep.subr.mxu0 0.0
    %125 = vmatpush1.msra.mxu0 0.0
    %126 = vmatprep.mubr.f32.mxu0 0.0
    %127 = vmatmul.mubr.f32.gmra.mrb[0].mxu0 %v60
    %v128 = vpop.f32.mrb[0].mxu0
    %v129 = vadd.f32 0.0, %v128
    %v130 = vpop.f32.mrb[0].mxu0
    %131 = vdwg.mxu0
    %132 = vst [vmem:[#allocation5] sm:$0xff] %v129
    // Predicated region
    $region14: #{tpu_custom_call.1} parent=1 // pred_check
      _
    $region15: #{tpu_custom_call.1} parent=1 // pred_check_branch
      %134 = sbr.rel (0) target = $region17
    $region16: #{tpu_custom_call.1} parent=1 // pred_region
      %s136 = ssub.s32 128, 128
      %137 = vsyncadd [#allocation4], %s136
      %s139 = sshll.u32 [#allocation5], 4
      %s140 = int_to_ptr.vmem [resolvable:$true] %s139
      %142 = dma.vmem_to_hbm [thread:$0]  %s140, 128, %s2, [#allocation4]
    $region17: #{tpu_custom_call.1} parent=1 // pred_fallthru
      _
    // Predicated region
    $region18: #{tpu_custom_call.1} parent=1 // pred_check
      _
    $region19: #{tpu_custom_call.1} parent=1 // pred_check_branch
      %144 = sbr.rel (0) target = $region21
    $region20: #{tpu_custom_call.1} parent=1 // pred_region
      %145 = dma.done [#allocation4], 128
    $region21: #{tpu_custom_call.1} parent=1 // pred_fallthru
      _
    %146 = vsyncpa [#allocation3], 1
    %147 = vsyncpa [#allocation4], 1

</llo_original>
